<compile_context>
chip_gen: v6e
topology: v6e:2x2x1
jax: 0.10.0
libtpu: 0.0.40
codegen_flags: <defaults>
</compile_context>

<pallas_src>
import numpy as np
import jax
import jax.numpy as jnp
from jax.experimental import pallas as pl
from jax.experimental.pallas import tpu as pltpu


def _round_up(n, m):
    return -(-n // m) * m


def _choose_b_tile(batch):
    """>=2 batch tiles when possible (both v7x TCs busy), <=256 rows/tile."""
    half = _round_up(-(-batch // 2), 8)
    return int(min(256, max(8, half)))


def _fm_kernel(idx_ref, table_ref, bias_ref, out_ref):
    """One grid step == one batch tile.

    idx_ref   : VMEM [b_tile, F]      int32   offset-adjusted ids (pad rows -> 0)
    table_ref : VMEM [Vp, 2*Hp+128]   float32 fused [E | E^2 | fc] table (resident)
    bias_ref  : SMEM [1]              float32
    out_ref   : VMEM [1, 1, b_tile]   float32 sigmoid(logit), lane-dense row
    """
    b_tile, num_fields = idx_ref.shape
    vp, wp = table_ref.shape
    hp = (wp - 128) // 2

    idx = idx_ref[...]                                              # [B, F]
    lane_v = jax.lax.broadcasted_iota(jnp.int32, (b_tile, vp), 1)   # [B, Vp]

    # Multi-hot counts over the (padded) vocab; F is small & static, so the
    # field loop is unrolled (one VPU compare + add per field).
    counts = jnp.zeros((b_tile, vp), jnp.float32)
    for f in range(num_fields):
        counts = counts + (lane_v == idx[:, f:f + 1]).astype(jnp.float32)

    # Single MXU pass over the fused table: one weight push/drain per step.
    r = jnp.dot(counts, table_ref[...], preferred_element_type=jnp.float32)

    s = r[:, :hp]                       # sum_f e_f            [B, Hp]
    sq = r[:, hp:2 * hp]                # sum_f e_f^2          [B, Hp]
    lin = r[:, 2 * hp:2 * hp + 1]       # linear term (lane 0) [B, 1]

    # Merged row reduction: one XLU cross-lane pass.
    fm = 0.5 * jnp.sum(s * s - sq, axis=-1, keepdims=True)          # [B, 1]
    logit = fm + lin + bias_ref[0]                                  # [B, 1]

    # Lane-dense (1, b_tile) store: tiny unmasked vst, minimal HBM writeback.
    out_ref[0] = jnp.transpose(jax.nn.sigmoid(logit), (1, 0))


def fm_prepare(embed_w, fc_w, bias):
    """One-time packing of the FM parameters into a fused, TPU-padded table.

    Cache the result alongside the module parameters (re-run only when the
    parameters change) so the forward hot path does no table re-padding.
    """
    V, H = embed_w.shape
    Vp = _round_up(V, 128)
    Hp = _round_up(H, 128)
    Wp = 2 * Hp + 128                      # [E | E^2 | fc in col 0 of a 128-lane block]

    e = embed_w.astype(jnp.float32)
    table = jnp.zeros((Vp, Wp), jnp.float32)
    table = table.at[:V, :H].set(e)
    table = table.at[:V, Hp:Hp + H].set(e * e)           # E^2 hoisted out of the kernel
    table = table.at[:V, 2 * Hp:2 * Hp + 1].set(fc_w.astype(jnp.float32))
    bias_arr = jnp.asarray(bias, jnp.float32).reshape(1)
    return {"table": table, "bias": bias_arr, "hp": Hp}


def fm_forward(x, prep, offsets):
    """Pallas-backed FM forward. x: [B, F] int32 raw (per-field) indices."""
    table = prep["table"]
    bias_arr = prep["bias"]
    Vp, Wp = table.shape

    B, F = x.shape
    idx = (x + offsets[None, :]).astype(jnp.int32)

    b_tile = _choose_b_tile(B)
    Bp = _round_up(B, b_tile)
    n_tiles = Bp // b_tile

    idx_p = jnp.zeros((Bp, F), jnp.int32).at[:B].set(idx)

    # ---- VMEM budget (bytes): resident table (single copy, untiled) +
    # double-buffered idx/out blocks + the big in-kernel intermediates. ----
    table_b = Vp * Wp * 4
    idx_b = 2 * b_tile * F * 4
    out_b = 2 * b_tile * 4
    counts_b = b_tile * Vp * 4
    r_b = b_tile * Wp * 4
    need = table_b + idx_b + out_b + counts_b + r_b
    assert need < 48 * 1024 * 1024, (
        "FM tables/intermediates exceed the v7x VMEM budget "
        f"({need} bytes); switch to the HBM gather design (see TODO).")
    vmem_limit = int(min(max(2 * need, 16 * 1024 * 1024), 48 * 1024 * 1024))

    out = pl.pallas_call(
        _fm_kernel,
        out_shape=jax.ShapeDtypeStruct((n_tiles, 1, b_tile), jnp.float32),
        grid=(n_tiles,),
        in_specs=[
            pl.BlockSpec((b_tile, F), lambda i: (i, 0)),             # per-tile ids
            pl.BlockSpec(memory_space=pltpu.MemorySpace.VMEM),       # resident fused table
            pl.BlockSpec(memory_space=pltpu.MemorySpace.SMEM),       # bias scalar
        ],
        out_specs=pl.BlockSpec((1, 1, b_tile), lambda i: (i, 0, 0)),
        compiler_params=pltpu.CompilerParams(
            dimension_semantics=("parallel",),   # batch tiles -> both TCs on v7x
            vmem_limit_bytes=vmem_limit,
        ),
    )(idx_p, table, bias_arr)

    return out.reshape(Bp)[:B]


def fm_reference(x, embed_w, fc_w, bias, offsets):
    """Pure-JAX reference mirroring the PyTorch forward."""
    idx = x + offsets[None, :]
    e = embed_w[idx]                                   # [B, F, H]
    lin = jnp.sum(fc_w[idx][..., 0], axis=1)           # [B]
    s = jnp.sum(e, axis=1)                             # [B, H]
    sum_sq = jnp.sum(s * s, axis=1)                    # [B]
    sq_sum = jnp.sum(jnp.sum(e * e, axis=1), axis=1)   # [B]
    fm = 0.5 * (sum_sq - sq_sum)
    return jax.nn.sigmoid(fm + lin + bias[0])


if __name__ == "__main__":
    # Module config (small, consistent with FM.__init__)
    field_dims = [3, 4, 5, 6]
    n_hidden = 32
    batch = 8

    embed_in = int(sum(field_dims))
    offsets = jnp.asarray(
        np.concatenate([[0], np.cumsum(field_dims)[:-1]]).astype(np.int32))

    key = jax.random.PRNGKey(0)
    k_idx, k_embed, k_fc = jax.random.split(key, 3)

    embed_w = 0.1 * jax.random.normal(k_embed, (embed_in, n_hidden), jnp.float32)
    fc_w = 0.1 * jax.random.normal(k_fc, (embed_in, 1), jnp.float32)
    bias = jnp.zeros((1,), jnp.float32)

    # Per-field categorical indices: x[:, f] in [0, field_dims[f])
    cols = []
    for f, d in enumerate(field_dims):
        k_idx, sub = jax.random.split(k_idx)
        cols.append(jax.random.randint(sub, (batch,), 0, d, dtype=jnp.int32))
    x = jnp.stack(cols, axis=1)                        # [batch, num_fields]

    prep = fm_prepare(embed_w, fc_w, bias)             # one-time table packing
    out = fm_forward(x, prep, offsets)
    out = jax.block_until_ready(out)

    ref = fm_reference(x, embed_w, fc_w, bias, offsets)
    assert out.shape == (batch,)
    # Tolerance accounts for the MXU's f32-matmul decomposition; structural
    # errors (wrong rows / formula) would show up at O(0.1) and still fail.
    assert np.allclose(np.asarray(out), np.asarray(ref), atol=2e-3, rtol=2e-3), (
        float(np.max(np.abs(np.asarray(out) - np.asarray(ref)))))

    print("KERNEL_OK")
</pallas_src>

<mosaic_0001>
module attributes {stable_mosaic.version = 11 : i64} {
  func.func @_fm_kernel(%arg0: i32, %arg1: memref<8x4xi32, #tpu.memory_space<vmem>>, %arg2: memref<128x384xf32, #tpu.memory_space<vmem>>, %arg3: memref<1xf32, #tpu.memory_space<smem>>, %arg4: memref<1x1x8xf32, #tpu.memory_space<vmem>>) attributes {dimension_semantics = [#tpu.dimension_semantics<parallel>], iteration_bounds = array<i64: 1>, scalar_prefetch = 0 : i64, scratch_operands = 0 : i64, tpu.core_type = #tpu.core_type<tc>, window_params = [{transform_indices = @transform_0, window_bounds = array<i64: 8, 4>}, {pipeline_mode = #tpu.pipeline_mode<synchronous>, transform_indices = @transform_1, window_bounds = array<i64: 128, 384>}, {transform_indices = @transform_2, window_bounds = array<i64: 1>}, {transform_indices = @transform_3, window_bounds = array<i64: 1, 1, 8>}]} {
    %c0 = arith.constant 0 : index
    %c0_0 = arith.constant 0 : index
    %0 = vector.load %arg1[%c0, %c0_0] : memref<8x4xi32, #tpu.memory_space<vmem>>, vector<8x4xi32>
    %1 = tpu.iota {dimensions = array<i32: 1>} : vector<8x128xi32>
    %cst = arith.constant 0.000000e+00 : f32
    %2 = vector.broadcast %cst : f32 to vector<8x128xf32>
    %3 = vector.extract_strided_slice %0 {offsets = [0, 0], sizes = [8, 1], strides = [1, 1]} : vector<8x4xi32> to vector<8x1xi32>
    %4 = vector.broadcast %3 : vector<8x1xi32> to vector<8x128xi32>
    %5 = arith.cmpi eq, %1, %4 : vector<8x128xi32>
    %6 = arith.extui %5 : vector<8x128xi1> to vector<8x128xi32>
    %7 = arith.sitofp %6 : vector<8x128xi32> to vector<8x128xf32>
    %8 = arith.addf %2, %7 : vector<8x128xf32>
    %9 = vector.extract_strided_slice %0 {offsets = [0, 1], sizes = [8, 1], strides = [1, 1]} : vector<8x4xi32> to vector<8x1xi32>
    %10 = vector.broadcast %9 : vector<8x1xi32> to vector<8x128xi32>
    %11 = arith.cmpi eq, %1, %10 : vector<8x128xi32>
    %12 = arith.extui %11 : vector<8x128xi1> to vector<8x128xi32>
    %13 = arith.sitofp %12 : vector<8x128xi32> to vector<8x128xf32>
    %14 = arith.addf %8, %13 : vector<8x128xf32>
    %15 = vector.extract_strided_slice %0 {offsets = [0, 2], sizes = [8, 1], strides = [1, 1]} : vector<8x4xi32> to vector<8x1xi32>
    %16 = vector.broadcast %15 : vector<8x1xi32> to vector<8x128xi32>
    %17 = arith.cmpi eq, %1, %16 : vector<8x128xi32>
    %18 = arith.extui %17 : vector<8x128xi1> to vector<8x128xi32>
    %19 = arith.sitofp %18 : vector<8x128xi32> to vector<8x128xf32>
    %20 = arith.addf %14, %19 : vector<8x128xf32>
    %21 = vector.extract_strided_slice %0 {offsets = [0, 3], sizes = [8, 1], strides = [1, 1]} : vector<8x4xi32> to vector<8x1xi32>
    %22 = vector.broadcast %21 : vector<8x1xi32> to vector<8x128xi32>
    %23 = arith.cmpi eq, %1, %22 : vector<8x128xi32>
    %24 = arith.extui %23 : vector<8x128xi1> to vector<8x128xi32>
    %25 = arith.sitofp %24 : vector<8x128xi32> to vector<8x128xf32>
    %26 = arith.addf %20, %25 : vector<8x128xf32>
    %c0_1 = arith.constant 0 : index
    %c0_2 = arith.constant 0 : index
    %27 = vector.load %arg2[%c0_1, %c0_2] : memref<128x384xf32, #tpu.memory_space<vmem>>, vector<128x384xf32>
    %cst_3 = arith.constant dense<0.000000e+00> : vector<8x384xf32>
    %28 = tpu.matmul %26, %27, %cst_3 {dimension_numbers = #tpu.dot_dimension_numbers<[1], [0], [0], [1], [0, 0, 1, 1], [], []>} : vector<8x128xf32>, vector<128x384xf32>, vector<8x384xf32> -> vector<8x384xf32>
    %29 = vector.extract_strided_slice %28 {offsets = [0, 0], sizes = [8, 128], strides = [1, 1]} : vector<8x384xf32> to vector<8x128xf32>
    %30 = vector.extract_strided_slice %28 {offsets = [0, 128], sizes = [8, 128], strides = [1, 1]} : vector<8x384xf32> to vector<8x128xf32>
    %31 = vector.extract_strided_slice %28 {offsets = [0, 256], sizes = [8, 1], strides = [1, 1]} : vector<8x384xf32> to vector<8x1xf32>
    %32 = arith.mulf %29, %29 : vector<8x128xf32>
    %33 = arith.subf %32, %30 : vector<8x128xf32>
    %cst_4 = arith.constant dense<0.000000e+00> : vector<8xf32>
    %34 = vector.multi_reduction <add>, %33, %cst_4 [1] : vector<8x128xf32> to vector<8xf32>
    %35 = vector.shape_cast %34 : vector<8xf32> to vector<8x1xf32>
    %cst_5 = arith.constant 5.000000e-01 : f32
    %36 = vector.broadcast %cst_5 : f32 to vector<8x1xf32>
    %37 = arith.mulf %36, %35 : vector<8x1xf32>
    %38 = arith.addf %37, %31 : vector<8x1xf32>
    %c0_6 = arith.constant 0 : index
    %39 = memref.load %arg3[%c0_6] : memref<1xf32, #tpu.memory_space<smem>>
    %40 = vector.broadcast %39 : f32 to vector<8x1xf32>
    %41 = arith.addf %38, %40 : vector<8x1xf32>
    %42 = arith.negf %41 : vector<8x1xf32>
    %43 = math.exp %42 : vector<8x1xf32>
    %cst_7 = arith.constant 1.000000e+00 : f32
    %44 = vector.broadcast %cst_7 : f32 to vector<8x1xf32>
    %45 = arith.addf %44, %43 : vector<8x1xf32>
    %46 = arith.divf %44, %45 : vector<8x1xf32>
    %47 = tpu.transpose %46, [1, 0] : vector<8x1xf32> -> vector<1x8xf32>
    %c0_8 = arith.constant 0 : index
    %c0_9 = arith.constant 0 : index
    %c0_10 = arith.constant 0 : index
    %48 = vector.load %arg4[%c0_8, %c0_9, %c0_10] : memref<1x1x8xf32, #tpu.memory_space<vmem>>, vector<1x1x8xf32>
    %49 = vector.shape_cast %48 : vector<1x1x8xf32> to vector<1x8xf32>
    %50 = vector.shape_cast %47 : vector<1x8xf32> to vector<1x1x8xf32>
    tpu.vector_store %arg4[%c0_8, %c0_9, %c0_10], %50 {strides = array<i32>} : memref<1x1x8xf32, #tpu.memory_space<vmem>>, vector<1x1x8xf32>,
    return
  }
  func.func @transform_0(%arg0: i32) -> (i32, i32) {
    %c0_i32 = arith.constant 0 : i32
    %c0_i32_0 = arith.constant 0 : i32
    return %arg0, %c0_i32 : i32, i32
  }
  func.func @transform_1(%arg0: i32) -> (i32, i32) {
    %c0_i32 = arith.constant 0 : i32
    %c0_i32_0 = arith.constant 0 : i32
    %c0_i32_1 = arith.constant 0 : i32
    return %c0_i32, %c0_i32_0 : i32, i32
  }
  func.func @transform_2(%arg0: i32) -> i32 {
    %c0_i32 = arith.constant 0 : i32
    %c0_i32_0 = arith.constant 0 : i32
    return %c0_i32 : i32
  }
  func.func @transform_3(%arg0: i32) -> (i32, i32, i32) {
    %c0_i32 = arith.constant 0 : i32
    %c0_i32_0 = arith.constant 0 : i32
    %c0_i32_1 = arith.constant 0 : i32
    return %arg0, %c0_i32, %c0_i32_0 : i32, i32, i32
  }
}

</mosaic_0001>

<llo_original>
// kernel: tpu_custom_call.1
$region0: #{tpu_custom_call.1}
  #allocation0 [shape = 'u32[]', space=smem, size = 0x4, offset = 0x4, fixed_abs, tag = 'smem constant byte address 0x4 - core index']
  #allocation1 [shape = 'u32[144,128]{1,0:T(1,128)}', space=vmem, size = 0x12000, scoped, tag = 'internal scratch']
  #allocation2 [shape = 'f32[1]{0:T(128)S(6)}', space=smem, size = 0x200, scoped, tag = 'scoped memory for tpu_custom_call.1']
  %s0 = inlined_call_operand.vmem [shape: s32[8,4], index: 0, kind: input, shape index: {}]
  %s1 = inlined_call_operand.hbm [shape: f32[128,384], index: 1, kind: input, shape index: {}]
  %s2 = inlined_call_operand.<no memory space> [shape: f32[1], index: 2, kind: input, shape index: {}]
  %s3 = inlined_call_operand.hbm [shape: f32[1,1,8], index: 3, kind: output, shape index: {}]
  %s4 = sld [smem:[#allocation0]]
  $region26: #{tpu_custom_call.1} parent=0
    _
  %s6 = ssub.s32 1, %s4
  %s7 = scalar_select 0, %s6, %s4
  %8 = sst [smem:[#allocation2]] %s2
  $region1: #{tpu_custom_call.1} parent=0
    #allocation3 [shape = 'u8[196608]{0}', space=vmem, size = 0x30000, scoped, tag = 'input window, operand 1, single buffered']
    #allocation4 [shape = 's32[1]{0}', space=sflag, size = 0x4, scoped, tag = 'scoped memory for tpu_custom_call.1']
    #allocation5 [shape = 's32[1]{0}', space=sflag, size = 0x4, scoped, tag = 'scoped memory for tpu_custom_call.1']
    #allocation6 [shape = 'u8[512]{0}', space=vmem, size = 0x400, scoped, tag = 'output window, operand 0, single buffered']
    %9 = vsyncpa [#allocation4], 0
    %10 = vsyncpa [#allocation5], 0
    // Predicated region
    $region2: #{tpu_custom_call.1} parent=1 // pred_check
      _
    $region3: #{tpu_custom_call.1} parent=1 // pred_check_branch
      %12 = sbr.rel (0) target = $region5
    $region4: #{tpu_custom_call.1} parent=1 // pred_region
      _
    $region5: #{tpu_custom_call.1} parent=1 // pred_fallthru
      _
    // Predicated region
    $region6: #{tpu_custom_call.1} parent=1 // pred_check
      _
    $region7: #{tpu_custom_call.1} parent=1 // pred_check_branch
      %14 = sbr.rel (0) target = $region9
    $region8: #{tpu_custom_call.1} parent=1 // pred_region
      %s16 = ssub.s32 6144, 6144
      %17 = vsyncadd [#allocation4], %s16
      %s18 = sshll.u32 [#allocation3], 4
      %s19 = int_to_ptr.vmem [resolvable:$true] %s18
      %24 = dma.hbm_to_vmem [thread:$0]  %s1, 6144, %s19, [#allocation4], 384, 384, 24
    $region9: #{tpu_custom_call.1} parent=1 // pred_fallthru
      _
    // Predicated region
    $region10: #{tpu_custom_call.1} parent=1 // pred_check
      _
    $region11: #{tpu_custom_call.1} parent=1 // pred_check_branch
      %26 = sbr.rel (0) target = $region13
    $region12: #{tpu_custom_call.1} parent=1 // pred_region
      _
    $region13: #{tpu_custom_call.1} parent=1 // pred_fallthru
      _
    // Predicated region
    $region14: #{tpu_custom_call.1} parent=1 // pred_check
      _
    $region15: #{tpu_custom_call.1} parent=1 // pred_check_branch
      %28 = sbr.rel (0) target = $region17
    $region16: #{tpu_custom_call.1} parent=1 // pred_region
      %29 = dma.done [#allocation4], 6144
    $region17: #{tpu_custom_call.1} parent=1 // pred_fallthru
      _
    %v30 = vld [vmem:[%s0] sm:$0xff]
    %v31 = vlaneseq
    %v32 = vand.u32 %v31, 127
    %33 = vset.pattern.permute.xlu0 0
    %34 = vperm.xlu0 %33, %v30
    %v35 = vpop.permute.xlu0 %34
    %vm36 = vcmp.eq.s32.totalorder %v32, %v35
    %v37 = vsel %vm36, 1, 0
    %v38 = vcvt.s32.f32 %v37
    %v39 = vadd.f32 %v38, 0.0
    %40 = vset.pattern.permute.xlu0 1
    %41 = vperm.xlu0 %40, %v30
    %v42 = vpop.permute.xlu0 %41
    %vm43 = vcmp.eq.s32.totalorder %v32, %v42
    %v44 = vsel %vm43, 1, 0
    %v45 = vcvt.s32.f32 %v44
    %v46 = vadd.f32 %v39, %v45
    %47 = vset.pattern.permute.xlu0 2
    %48 = vperm.xlu0 %47, %v30
    %v49 = vpop.permute.xlu0 %48
    %vm50 = vcmp.eq.s32.totalorder %v32, %v49
    %v51 = vsel %vm50, 1, 0
    %v52 = vcvt.s32.f32 %v51
    %v53 = vadd.f32 %v46, %v52
    %54 = vset.pattern.permute.xlu0 3
    %55 = vperm.xlu0 %54, %v30
    %v56 = vpop.permute.xlu0 %55
    %vm57 = vcmp.eq.s32.totalorder %v32, %v56
    %v58 = vsel %vm57, 1, 0
    %v59 = vcvt.s32.f32 %v58
    %v60 = vadd.f32 %v53, %v59
    %v61 = vld [vmem:[#allocation3] sm:$0xff]
    %v62 = vld [vmem:[#allocation3 + $0x8] sm:$0xff]
    %v63 = vld [vmem:[#allocation3 + $0x10] sm:$0xff]
    %v64 = vld [vmem:[#allocation3 + $0x18] sm:$0xff]
    %v65 = vld [vmem:[#allocation3 + $0x20] sm:$0xff]
    %v66 = vld [vmem:[#allocation3 + $0x28] sm:$0xff]
    %v67 = vld [vmem:[#allocation3 + $0x30] sm:$0xff]
    %v68 = vld [vmem:[#allocation3 + $0x38] sm:$0xff]
    %v69 = vld [vmem:[#allocation3 + $0x40] sm:$0xff]
    %v70 = vld [vmem:[#allocation3 + $0x48] sm:$0xff]
    %v71 = vld [vmem:[#allocation3 + $0x50] sm:$0xff]
    %v72 = vld [vmem:[#allocation3 + $0x58] sm:$0xff]
    %v73 = vld [vmem:[#allocation3 + $0x60] sm:$0xff]
    %v74 = vld [vmem:[#allocation3 + $0x68] sm:$0xff]
    %v75 = vld [vmem:[#allocation3 + $0x70] sm:$0xff]
    %v76 = vld [vmem:[#allocation3 + $0x78] sm:$0xff]
    %v77 = vld [vmem:[#allocation3 + $0x80] sm:$0xff]
    %v78 = vld [vmem:[#allocation3 + $0x88] sm:$0xff]
    %v79 = vld [vmem:[#allocation3 + $0x90] sm:$0xff]
    %v80 = vld [vmem:[#allocation3 + $0x98] sm:$0xff]
    %v81 = vld [vmem:[#allocation3 + $0xa0] sm:$0xff]
    %v82 = vld [vmem:[#allocation3 + $0xa8] sm:$0xff]
    %v83 = vld [vmem:[#allocation3 + $0xb0] sm:$0xff]
    %v84 = vld [vmem:[#allocation3 + $0xb8] sm:$0xff]
    %v85 = vld [vmem:[#allocation3 + $0xc0] sm:$0xff]
    %v86 = vld [vmem:[#allocation3 + $0xc8] sm:$0xff]
    %v87 = vld [vmem:[#allocation3 + $0xd0] sm:$0xff]
    %v88 = vld [vmem:[#allocation3 + $0xd8] sm:$0xff]
    %v89 = vld [vmem:[#allocation3 + $0xe0] sm:$0xff]
    %v90 = vld [vmem:[#allocation3 + $0xe8] sm:$0xff]
    %v91 = vld [vmem:[#allocation3 + $0xf0] sm:$0xff]
    %v92 = vld [vmem:[#allocation3 + $0xf8] sm:$0xff]
    %v93 = vld [vmem:[#allocation3 + $0x100] sm:$0xff]
    %v94 = vld [vmem:[#allocation3 + $0x108] sm:$0xff]
    %v95 = vld [vmem:[#allocation3 + $0x110] sm:$0xff]
    %v96 = vld [vmem:[#allocation3 + $0x118] sm:$0xff]
    %v97 = vld [vmem:[#allocation3 + $0x120] sm:$0xff]
    %v98 = vld [vmem:[#allocation3 + $0x128] sm:$0xff]
    %v99 = vld [vmem:[#allocation3 + $0x130] sm:$0xff]
    %v100 = vld [vmem:[#allocation3 + $0x138] sm:$0xff]
    %v101 = vld [vmem:[#allocation3 + $0x140] sm:$0xff]
    %v102 = vld [vmem:[#allocation3 + $0x148] sm:$0xff]
    %v103 = vld [vmem:[#allocation3 + $0x150] sm:$0xff]
    %v104 = vld [vmem:[#allocation3 + $0x158] sm:$0xff]
    %v105 = vld [vmem:[#allocation3 + $0x160] sm:$0xff]
    %v106 = vld [vmem:[#allocation3 + $0x168] sm:$0xff]
    %v107 = vld [vmem:[#allocation3 + $0x170] sm:$0xff]
    %v108 = vld [vmem:[#allocation3 + $0x178] sm:$0xff]
    %109 = vmatprep.subr.mxu0 %v107
    %110 = vmatpush1.msra.mxu0 %v106
    %111 = vmatprep.subr.mxu0 %v104
    %112 = vmatpush1.msra.mxu0 %v103
    %113 = vmatprep.subr.mxu0 %v101
    %114 = vmatpush1.msra.mxu0 %v100
    %115 = vmatprep.subr.mxu0 %v98
    %116 = vmatpush1.msra.mxu0 %v97
    %117 = vmatprep.subr.mxu0 %v95
    %118 = vmatpush1.msra.mxu0 %v94
    %119 = vmatprep.subr.mxu0 %v92
    %120 = vmatpush1.msra.mxu0 %v91
    %121 = vmatprep.subr.mxu0 %v89
    %122 = vmatpush1.msra.mxu0 %v88
    %123 = vmatprep.subr.mxu0 %v86
    %124 = vmatpush1.msra.mxu0 %v85
    %125 = vmatprep.subr.mxu0 %v83
    %126 = vmatpush1.msra.mxu0 %v82
    %127 = vmatprep.subr.mxu0 %v80
    %128 = vmatpush1.msra.mxu0 %v79
    %129 = vmatprep.subr.mxu0 %v77
    %130 = vmatpush1.msra.mxu0 %v76
    %131 = vmatprep.subr.mxu0 %v74
    %132 = vmatpush1.msra.mxu0 %v73
    %133 = vmatprep.subr.mxu0 %v71
    %134 = vmatpush1.msra.mxu0 %v70
    %135 = vmatprep.subr.mxu0 %v68
    %136 = vmatpush1.msra.mxu0 %v67
    %137 = vmatprep.subr.mxu0 %v65
    %138 = vmatpush1.msra.mxu0 %v64
    %139 = vmatprep.subr.mxu0 %v62
    %140 = vmatpush1.msra.mxu0 %v61
    %141 = vmatprep.subr.mxu0 0.0
    %142 = vmatpush2.msra.mxu0 0.0
    %143 = vmatprep.subr.mxu0 0.0
    %144 = vmatpush2.msra.mxu0 0.0
    %145 = vmatprep.subr.mxu0 0.0
    %146 = vmatpush2.msra.mxu0 0.0
    %147 = vmatprep.subr.mxu0 0.0
    %148 = vmatpush2.msra.mxu0 0.0
    %149 = vmatprep.subr.mxu0 0.0
    %150 = vmatpush2.msra.mxu0 0.0
    %151 = vmatprep.subr.mxu0 0.0
    %152 = vmatpush2.msra.mxu0 0.0
    %153 = vmatprep.subr.mxu0 0.0
    %154 = vmatpush2.msra.mxu0 0.0
    %155 = vmatprep.subr.mxu0 0.0
    %156 = vmatpush2.msra.mxu0 0.0
    %157 = vmatprep.subr.mxu0 0.0
    %158 = vmatpush2.msra.mxu0 0.0
    %159 = vmatprep.subr.mxu0 0.0
    %160 = vmatpush2.msra.mxu0 0.0
    %161 = vmatprep.subr.mxu0 0.0
    %162 = vmatpush2.msra.mxu0 0.0
    %163 = vmatprep.subr.mxu0 0.0
    %164 = vmatpush2.msra.mxu0 0.0
    %165 = vmatprep.subr.mxu0 0.0
    %166 = vmatpush2.msra.mxu0 0.0
    %167 = vmatprep.subr.mxu0 0.0
    %168 = vmatpush2.msra.mxu0 0.0
    %169 = vmatprep.subr.mxu0 0.0
    %170 = vmatpush2.msra.mxu0 0.0
    %171 = vmatprep.subr.mxu0 0.0
    %172 = vmatpush2.msra.mxu0 0.0
    %173 = vmatprep.mubr.f32.mxu0 0.0
    %174 = vmatmul.mubr.f32.gmra.mxu0 %v60
    %v175 = vpop.f32.mrf.mxu0
    %v176 = vadd.f32 0.0, %v175
    %v177 = vpop.f32.mrf.mxu0
    %v178 = vadd.f32 0.0, %v177
    %179 = vdwg.mxu0
    %180 = vmatprep.subr.mxu0 0.0
    %181 = vmatpush1.msra.mxu0 %v108
    %182 = vmatprep.subr.mxu0 0.0
    %183 = vmatpush1.msra.mxu0 %v105
    %184 = vmatprep.subr.mxu0 0.0
    %185 = vmatpush1.msra.mxu0 %v102
    %186 = vmatprep.subr.mxu0 0.0
    %187 = vmatpush1.msra.mxu0 %v99
    %188 = vmatprep.subr.mxu0 0.0
    %189 = vmatpush1.msra.mxu0 %v96
    %190 = vmatprep.subr.mxu0 0.0
    %191 = vmatpush1.msra.mxu0 %v93
    %192 = vmatprep.subr.mxu0 0.0
    %193 = vmatpush1.msra.mxu0 %v90
    %194 = vmatprep.subr.mxu0 0.0
    %195 = vmatpush1.msra.mxu0 %v87
    %196 = vmatprep.subr.mxu0 0.0
    %197 = vmatpush1.msra.mxu0 %v84
    %198 = vmatprep.subr.mxu0 0.0
    %199 = vmatpush1.msra.mxu0 %v81
    %200 = vmatprep.subr.mxu0 0.0
    %201 = vmatpush1.msra.mxu0 %v78
    %202 = vmatprep.subr.mxu0 0.0
    %203 = vmatpush1.msra.mxu0 %v75
    %204 = vmatprep.subr.mxu0 0.0
    %205 = vmatpush1.msra.mxu0 %v72
    %206 = vmatprep.subr.mxu0 0.0
    %207 = vmatpush1.msra.mxu0 %v69
    %208 = vmatprep.subr.mxu0 0.0
    %209 = vmatpush1.msra.mxu0 %v66
    %210 = vmatprep.subr.mxu0 0.0
    %211 = vmatpush1.msra.mxu0 %v63
    %212 = vmatprep.subr.mxu0 0.0
    %213 = vmatpush2.msra.mxu0 0.0
    %214 = vmatprep.subr.mxu0 0.0
    %215 = vmatpush2.msra.mxu0 0.0
    %216 = vmatprep.subr.mxu0 0.0
    %217 = vmatpush2.msra.mxu0 0.0
    %218 = vmatprep.subr.mxu0 0.0
    %219 = vmatpush2.msra.mxu0 0.0
    %220 = vmatprep.subr.mxu0 0.0
    %221 = vmatpush2.msra.mxu0 0.0
    %222 = vmatprep.subr.mxu0 0.0
    %223 = vmatpush2.msra.mxu0 0.0
    %224 = vmatprep.subr.mxu0 0.0
    %225 = vmatpush2.msra.mxu0 0.0
    %226 = vmatprep.subr.mxu0 0.0
    %227 = vmatpush2.msra.mxu0 0.0
    %228 = vmatprep.subr.mxu0 0.0
    %229 = vmatpush2.msra.mxu0 0.0
    %230 = vmatprep.subr.mxu0 0.0
    %231 = vmatpush2.msra.mxu0 0.0
    %232 = vmatprep.subr.mxu0 0.0
    %233 = vmatpush2.msra.mxu0 0.0
    %234 = vmatprep.subr.mxu0 0.0
    %235 = vmatpush2.msra.mxu0 0.0
    %236 = vmatprep.subr.mxu0 0.0
    %237 = vmatpush2.msra.mxu0 0.0
    %238 = vmatprep.subr.mxu0 0.0
    %239 = vmatpush2.msra.mxu0 0.0
    %240 = vmatprep.subr.mxu0 0.0
    %241 = vmatpush2.msra.mxu0 0.0
    %242 = vmatprep.subr.mxu0 0.0
    %243 = vmatpush2.msra.mxu0 0.0
    %244 = vmatprep.mubr.f32.mxu0 0.0
    %245 = vmatmul.mubr.f32.gmra.mxu0 %v60
    %v246 = vpop.f32.mrf.mxu0
    %v247 = vadd.f32 0.0, %v246
    %v248 = vpop.f32.mrf.mxu0
    %249 = vdwg.mxu0
    %v250 = vmul.f32 %v176, %v176
    %v251 = vsub.f32 %v250, %v178
    %252 = vadd.xlane.f32.xlu0 %v251
    %v253 = vpop.xlane.xlu0 %252
    %v254 = vmul.f32 %v253, 0.5
    %v255 = vadd.f32 %v254, %v247
    %s256 = sld [smem:[#allocation2]]
    %v257 = vstv %s256
    %v258 = vadd.f32 %v255, %v257
    %v259 = vxor.u32 %v258, 2147483648
    %v260 = vmul.f32 %v259, 1.442695
    %v261 = vpow.pop %v260
    %v262 = vadd.f32 %v261, 1.0
    %v263 = vrcp.pop %v262
    %v264 = vmul.f32 1.0, %v263
    %265 = vxpose.xlu0.b32.start [1/16] %v264, 128
    %266 = vxpose.xlu0.b32.cont [2/16] 0.0, 128
    %267 = vxpose.xlu0.b32.cont [3/16] 0.0, 128
    %268 = vxpose.xlu0.b32.cont [4/16] 0.0, 128
    %269 = vxpose.xlu0.b32.cont [5/16] 0.0, 128
    %270 = vxpose.xlu0.b32.cont [6/16] 0.0, 128
    %271 = vxpose.xlu0.b32.cont [7/16] 0.0, 128
    %272 = vxpose.xlu0.b32.cont [8/16] 0.0, 128
    %273 = vxpose.xlu0.b32.cont [9/16] 0.0, 128
    %274 = vxpose.xlu0.b32.cont [10/16] 0.0, 128
    %275 = vxpose.xlu0.b32.cont [11/16] 0.0, 128
    %276 = vxpose.xlu0.b32.cont [12/16] 0.0, 128
    %277 = vxpose.xlu0.b32.cont [13/16] 0.0, 128
    %278 = vxpose.xlu0.b32.cont [14/16] 0.0, 128
    %279 = vxpose.xlu0.b32.cont [15/16] 0.0, 128
    %280 = vxpose.xlu0.b32.end [16/16] 0.0, 128
    %v281 = vpop.trf.xlu0
    %v282 = vpop.trf.xlu0
    %v283 = vpop.trf.xlu0
    %v284 = vpop.trf.xlu0
    %v285 = vpop.trf.xlu0
    %v286 = vpop.trf.xlu0
    %v287 = vpop.trf.xlu0
    %v288 = vpop.trf.xlu0
    %v289 = vpop.trf.xlu0
    %v290 = vpop.trf.xlu0
    %v291 = vpop.trf.xlu0
    %v292 = vpop.trf.xlu0
    %v293 = vpop.trf.xlu0
    %v294 = vpop.trf.xlu0
    %v295 = vpop.trf.xlu0
    %v296 = vpop.trf.xlu0
    %vm297 = vcmask 57344
    %298 = vst.msk [vmem:[#allocation6] sm:$0x1] %vm297, %v281
    // Predicated region
    $region18: #{tpu_custom_call.1} parent=1 // pred_check
      _
    $region19: #{tpu_custom_call.1} parent=1 // pred_check_branch
      %300 = sbr.rel (0) target = $region21
    $region20: #{tpu_custom_call.1} parent=1 // pred_region
      %s302 = ssub.s32 16, 16
      %303 = vsyncadd [#allocation5], %s302
      %s305 = sshll.u32 [#allocation6], 4
      %s306 = int_to_ptr.vmem [resolvable:$true] %s305
      %308 = dma.vmem_to_hbm [thread:$0]  %s306, 16, %s3, [#allocation5]
    $region21: #{tpu_custom_call.1} parent=1 // pred_fallthru
      _
    // Predicated region
    $region22: #{tpu_custom_call.1} parent=1 // pred_check
      _
    $region23: #{tpu_custom_call.1} parent=1 // pred_check_branch
      %310 = sbr.rel (0) target = $region25
    $region24: #{tpu_custom_call.1} parent=1 // pred_region
      %311 = dma.done [#allocation5], 16
    $region25: #{tpu_custom_call.1} parent=1 // pred_fallthru
      _
    %312 = vsyncpa [#allocation4], 1
    %313 = vsyncpa [#allocation5], 1

</llo_original>
